<compile_context>
chip_gen: v7x
topology: tpu7x:2x2x1
jax: 0.10.0
libtpu: 0.0.40
codegen_flags: <defaults>
</compile_context>

<pallas_src>
import functools
from typing import NamedTuple, Optional

import jax
import jax.numpy as jnp
import numpy as np
from jax.experimental import pallas as pl
from jax.experimental.pallas import tpu as pltpu


def _round_up(x: int, m: int) -> int:
    return (x + m - 1) // m * m


def _vmem_limit_bytes() -> int:
    # ~3/4 of physical VMEM: 96 MiB on v5e/v6e (128 MiB), 48 MiB on v7x (64 MiB).
    try:
        cap = int(pltpu.get_tpu_info().vmem_capacity_bytes)
    except Exception:
        cap = 64 * 1024 * 1024
    return min(cap * 3 // 4, 96 * 1024 * 1024)


def _pick_block_sizes(n: int):
    # The bf16 adjacency tile dominates VMEM: 512x1024 = 1 MiB (2 MiB double
    # buffered) -> fits the v7x 64 MiB budget with room to spare while large
    # enough to amortize the ~0.35 us/step grid overhead on v5e/v6e.
    # (On v7x keep num_m >= 2 so the row axis shards across both TensorCores.)
    lane = _round_up(max(n, 1), 128)
    bm = min(512, lane)
    bk = min(1024, lane)
    if bk % bm != 0:
        bk = bm
    return bm, bk


class GraphData(NamedTuple):
    adj: jax.Array      # (n_pad, n_pad) bf16, zero-padded
    drow: jax.Array     # (n_pad, 1) f32 row-side normalization scale
    dcol: jax.Array     # (n_pad, 1) f32 column-side normalization scale
    n: int
    n_pad: int
    block_m: int
    block_k: int


# --------------------------------------------------------------------------
# Graph preprocessing kernel (runs once per graph): degree -> (drow, dcol).
#   sym: drow = dcol = deg^{-1/2}        (D^{-1/2} A D^{-1/2})
#   rw : drow = deg^{-1}, dcol = 1       (D^{-1} A)
# --------------------------------------------------------------------------
def _degree_kernel(adj_ref, ones_ref, drow_ref, dcol_ref, acc_ref, *,
                   normalization):
    k = pl.program_id(1)

    @pl.when(k == 0)
    def _init():
        acc_ref[...] = jnp.zeros_like(acc_ref)

    # Row-sum on the (otherwise idle) MXU: all-ones bf16 RHS -> every result
    # column equals the row sum.  Exact for 0/1 edges with f32 accumulation,
    # and avoids materializing an f32 upcast of the whole adjacency tile.
    acc_ref[...] += jnp.dot(adj_ref[...], ones_ref[...],
                            preferred_element_type=jnp.float32)

    @pl.when(k == pl.num_programs(1) - 1)
    def _finalize():
        deg = acc_ref[:, 0:1]
        if normalization == "sym":
            s = jnp.where(deg > 0.0, jax.lax.rsqrt(deg), 0.0)
            drow_ref[...] = s
            dcol_ref[...] = s
        else:  # "rw"  -- exact reciprocal: once per graph, not on the hot path.
            drow_ref[...] = jnp.where(deg > 0.0, 1.0 / deg, 0.0)
            dcol_ref[...] = jnp.ones_like(deg)


def prepare_graph(adj, *, normalization: str = "sym",
                  block_m: Optional[int] = None,
                  block_k: Optional[int] = None) -> GraphData:
    """Pad/cast the adjacency and compute normalization scales ONCE per graph."""
    if normalization not in ("sym", "rw"):
        raise ValueError("Invalid normalization type. Choose 'sym' or 'rw'.")
    n = adj.shape[0]
    assert adj.shape[0] == adj.shape[1]

    auto_bm, auto_bk = _pick_block_sizes(n)
    block_m = auto_bm if block_m is None else block_m
    block_k = auto_bk if block_k is None else block_k
    assert block_m % 8 == 0 and block_k % 128 == 0
    big, small = max(block_m, block_k), min(block_m, block_k)
    assert big % small == 0, "block_m/block_k must divide each other"
    n_pad = _round_up(n, big)
    num_m, num_k = n_pad // block_m, n_pad // block_k

    # Zero padding -> deg 0 -> scale 0 -> padded rows are discarded by slicing.
    adj_p = jnp.pad(adj.astype(jnp.bfloat16),
                    ((0, n_pad - n), (0, n_pad - n)))
    ones = jnp.ones((block_k, 128), jnp.bfloat16)

    cparams = pltpu.CompilerParams(
        dimension_semantics=("parallel", "arbitrary"),
        vmem_limit_bytes=_vmem_limit_bytes())

    drow, dcol = pl.pallas_call(
        functools.partial(_degree_kernel, normalization=normalization),
        out_shape=(jax.ShapeDtypeStruct((n_pad, 1), jnp.float32),
                   jax.ShapeDtypeStruct((n_pad, 1), jnp.float32)),
        grid_spec=pltpu.PrefetchScalarGridSpec(
            num_scalar_prefetch=0, grid=(num_m, num_k),
            in_specs=[pl.BlockSpec((block_m, block_k), lambda i, k: (i, k)),
                      pl.BlockSpec((block_k, 128), lambda i, k: (0, 0))],
            out_specs=[pl.BlockSpec((block_m, 1), lambda i, k: (i, 0)),
                       pl.BlockSpec((block_m, 1), lambda i, k: (i, 0))],
            scratch_shapes=[pltpu.VMEM((block_m, 128), jnp.float32)]),
        compiler_params=cparams,
        cost_estimate=pl.CostEstimate(
            flops=2 * n_pad * n_pad * 128, transcendentals=n_pad,
            bytes_accessed=n_pad * n_pad * 2 + 2 * n_pad * 4),
    )(adj_p, ones)

    return GraphData(adj_p, drow, dcol, n, n_pad, block_m, block_k)


# --------------------------------------------------------------------------
# Per-layer kernel: tiled  acc += A @ Y  (Y = (dcol*X)@Wg^T precomputed, bf16),
# finalize  out = relu(drow * acc + R)   (R = X@Wr^T + br precomputed, f32).
# --------------------------------------------------------------------------
def _gcn_kernel(adj_ref, y_ref, drow_ref, res_ref, o_ref, acc_ref):
    k = pl.program_id(1)

    @pl.when(k == 0)
    def _init():
        acc_ref[...] = jnp.zeros_like(acc_ref)

    # Hot loop: one lane-dense bf16 MXU matmul, f32 accumulation.
    acc_ref[...] += jnp.dot(adj_ref[...], y_ref[...],
                            preferred_element_type=jnp.float32)

    @pl.when(k == pl.num_programs(1) - 1)
    def _finalize():
        o_ref[...] = jnp.maximum(drow_ref[...] * acc_ref[...] + res_ref[...],
                                 0.0)


def residual_gcn_forward(graph: GraphData, feat, wg_t, wr_t=None, br=None):
    """out = relu( drow * (A @ (dcol*X)) @ Wg^T  +  X @ Wr^T + br ).

    feat:(N,in)  wg_t:(in,out)  wr_t:(in,out) or None (identity residual)
    br:(1,out) or None.  Returns (N,out) f32.

    Note: Wg is folded into the features (associativity) so the K loop streams a
    lane-dense bf16 operand.  For out_features >> in_features an un-folded
    variant (stream X, matmul Wg in the finalize) would use less HBM.
    """
    n, n_pad = graph.n, graph.n_pad
    block_m, block_k = graph.block_m, graph.block_k
    in_dim = feat.shape[1]
    out_dim = wg_t.shape[1]
    out_pad = _round_up(out_dim, 128)          # lane-dense output stores
    num_m, num_k = n_pad // block_m, n_pad // block_k
    f32 = jnp.float32
    hp = jax.lax.Precision.HIGHEST

    feat_p = jnp.pad(feat.astype(f32), ((0, n_pad - n), (0, 0)))

    # Fold column normalization + GCN weight into the features (tiny XLA GEMM,
    # O(N*in*out) flops) -> bf16 for the MXU feed in the hot loop.
    y = jnp.dot(graph.dcol * feat_p, wg_t.astype(f32), precision=hp)
    y = jnp.pad(y, ((0, 0), (0, out_pad - out_dim))).astype(jnp.bfloat16)

    # Residual branch (+ bias) precomputed in XLA, streamed per row tile.
    if wr_t is None:
        assert in_dim == out_dim, "identity residual requires in == out"
        res = feat_p
    else:
        res = jnp.dot(feat_p, wr_t.astype(f32), precision=hp)
    if br is not None:
        res = res + jnp.reshape(br.astype(f32), (1, -1))
    res = jnp.pad(res, ((0, 0), (0, out_pad - out_dim)))

    cparams = pltpu.CompilerParams(
        dimension_semantics=("parallel", "arbitrary"),
        vmem_limit_bytes=_vmem_limit_bytes())

    flops = 2 * n_pad * n_pad * out_pad
    bytes_accessed = (n_pad * n_pad * 2                  # A (read exactly once)
                      + num_m * n_pad * out_pad * 2      # Y re-read per row tile
                      + n_pad * 4                        # drow
                      + 2 * n_pad * out_pad * 4)         # R read + out write

    out = pl.pallas_call(
        _gcn_kernel,
        out_shape=jax.ShapeDtypeStruct((n_pad, out_pad), f32),
        grid_spec=pltpu.PrefetchScalarGridSpec(
            num_scalar_prefetch=0, grid=(num_m, num_k),
            in_specs=[
                pl.BlockSpec((block_m, block_k), lambda i, k: (i, k)),  # A
                pl.BlockSpec((block_k, out_pad), lambda i, k: (k, 0)),  # Y
                pl.BlockSpec((block_m, 1), lambda i, k: (i, 0)),        # drow
                pl.BlockSpec((block_m, out_pad), lambda i, k: (i, 0)),  # R
            ],
            out_specs=pl.BlockSpec((block_m, out_pad), lambda i, k: (i, 0)),
            scratch_shapes=[pltpu.VMEM((block_m, out_pad), f32)]),
        compiler_params=cparams,
        cost_estimate=pl.CostEstimate(flops=flops, transcendentals=0,
                                      bytes_accessed=bytes_accessed),
    )(graph.adj, y, graph.drow, res)

    return out[:n, :out_dim]


# --------------------------------------------------------------------------
# Pure-numpy reference (mirrors the kernel's bf16 MXU feed of A and Y).
# --------------------------------------------------------------------------
def _reference(adj, feat, wg_t, wr_t, br, normalization="sym"):
    adj = np.asarray(adj, np.float32)
    feat = np.asarray(feat, np.float32)
    wg_t = np.asarray(wg_t, np.float32)
    wr_t = np.asarray(wr_t, np.float32)
    br = np.asarray(br, np.float32).reshape(1, -1)

    deg = adj.sum(axis=1)
    safe = np.maximum(deg, 1e-30)
    if normalization == "sym":
        drow = np.where(deg > 0, 1.0 / np.sqrt(safe), 0.0)
        dcol = drow
    else:
        drow = np.where(deg > 0, 1.0 / safe, 0.0)
        dcol = np.ones_like(drow)

    def _bf16(x):
        return np.asarray(jnp.asarray(x).astype(jnp.bfloat16).astype(jnp.float32))

    a16 = _bf16(adj)                              # exact for 0/1 adjacency
    y16 = _bf16((dcol[:, None] * feat) @ wg_t)    # matches in-wrapper bf16 cast
    h = drow[:, None] * (a16 @ y16)
    return np.maximum(h + feat @ wr_t + br, 0.0)


if __name__ == "__main__":
    N, IN_DIM, OUT_DIM = 200, 16, 32      # num_nodes, in_features, out_features
    key = jax.random.PRNGKey(0)
    k_adj, k_feat, k_wg, k_wr, k_br = jax.random.split(key, 5)

    # Random symmetric binary adjacency with self loops (dense; the PyTorch
    # sparse adjacency densifies to the same math).
    a = (jax.random.uniform(k_adj, (N, N)) < 0.1).astype(jnp.float32)
    adj = jnp.clip(a + a.T + jnp.eye(N, dtype=jnp.float32), 0.0, 1.0)
    feat = jax.random.normal(k_feat, (N, IN_DIM), dtype=jnp.float32)

    # nn.Linear-style uniform init; weights passed pre-transposed to the kernel.
    bound = 1.0 / np.sqrt(IN_DIM)
    wg = jax.random.uniform(k_wg, (OUT_DIM, IN_DIM), minval=-bound, maxval=bound)
    wr = jax.random.uniform(k_wr, (OUT_DIM, IN_DIM), minval=-bound, maxval=bound)
    br = jax.random.uniform(k_br, (1, OUT_DIM), minval=-bound, maxval=bound)
    wg_t = wg.T.astype(jnp.float32)      # GCNLayer.linear (no bias)
    wr_t = wr.T.astype(jnp.float32)      # residual nn.Linear(in, out)
    br = br.astype(jnp.float32)

    for norm in ("sym", "rw"):
        # Graph prep (pad/cast + degree kernel) runs once per graph and is
        # reusable across layers/steps; the forward reads A exactly once.
        graph = prepare_graph(adj, normalization=norm,
                              block_m=128, block_k=128)   # small demo tiles
        out = residual_gcn_forward(graph, feat, wg_t, wr_t, br)
        out = jax.block_until_ready(out)
        ref = _reference(adj, feat, wg_t, wr_t, br, normalization=norm)
        np.testing.assert_allclose(np.asarray(out), ref, rtol=1e-2, atol=1e-2)

    print("KERNEL_OK")
</pallas_src>

<mosaic_0001>
module attributes {stable_mosaic.version = 11 : i64} {
  func.func @_degree_kernel(%arg0: i32, %arg1: i32, %arg2: memref<128x128xbf16, #tpu.memory_space<vmem>>, %arg3: memref<128x128xbf16, #tpu.memory_space<vmem>>, %arg4: memref<128x1xf32, #tpu.memory_space<vmem>>, %arg5: memref<128x1xf32, #tpu.memory_space<vmem>>, %arg6: memref<128x128xf32, #tpu.memory_space<vmem>>) attributes {dimension_semantics = [#tpu.dimension_semantics<parallel>, #tpu.dimension_semantics<arbitrary>], iteration_bounds = array<i64: 2, 2>, scalar_prefetch = 0 : i64, scratch_operands = 1 : i64, tpu.core_type = #tpu.core_type<tc>, window_params = [{transform_indices = @transform_0, window_bounds = array<i64: 128, 128>}, {pipeline_mode = #tpu.pipeline_mode<synchronous>, transform_indices = @transform_1, window_bounds = array<i64: 128, 128>}, {transform_indices = @transform_2, window_bounds = array<i64: 128, 1>}, {transform_indices = @transform_3, window_bounds = array<i64: 128, 1>}]} {
    %c0_i32 = arith.constant 0 : i32
    %0 = arith.cmpi eq, %arg1, %c0_i32 : i32
    %1 = arith.extui %0 : i1 to i32
    %c0_i32_0 = arith.constant 0 : i32
    %2 = arith.cmpi ne, %1, %c0_i32_0 : i32
    scf.if %2 {
      %cst_9 = arith.constant 0.000000e+00 : f32
      %12 = vector.broadcast %cst_9 : f32 to vector<128x128xf32>
      %c0_10 = arith.constant 0 : index
      %c0_11 = arith.constant 0 : index
      %13 = vector.load %arg6[%c0_10, %c0_11] : memref<128x128xf32, #tpu.memory_space<vmem>>, vector<128x128xf32>
      tpu.vector_store %arg6[%c0_10, %c0_11], %12 {strides = array<i32>} : memref<128x128xf32, #tpu.memory_space<vmem>>, vector<128x128xf32>,
    } else {
    }
    %c0 = arith.constant 0 : index
    %c0_1 = arith.constant 0 : index
    %3 = vector.load %arg6[%c0, %c0_1] : memref<128x128xf32, #tpu.memory_space<vmem>>, vector<128x128xf32>
    %c0_2 = arith.constant 0 : index
    %c0_3 = arith.constant 0 : index
    %4 = vector.load %arg2[%c0_2, %c0_3] : memref<128x128xbf16, #tpu.memory_space<vmem>>, vector<128x128xbf16>
    %c0_4 = arith.constant 0 : index
    %c0_5 = arith.constant 0 : index
    %5 = vector.load %arg3[%c0_4, %c0_5] : memref<128x128xbf16, #tpu.memory_space<vmem>>, vector<128x128xbf16>
    %cst = arith.constant dense<0.000000e+00> : vector<128x128xf32>
    %6 = tpu.matmul %4, %5, %cst {dimension_numbers = #tpu.dot_dimension_numbers<[1], [0], [0], [1], [0, 0, 1, 1], [], []>} : vector<128x128xbf16>, vector<128x128xbf16>, vector<128x128xf32> -> vector<128x128xf32>
    %7 = arith.addf %3, %6 : vector<128x128xf32>
    %c0_6 = arith.constant 0 : index
    %c0_7 = arith.constant 0 : index
    %8 = vector.load %arg6[%c0_6, %c0_7] : memref<128x128xf32, #tpu.memory_space<vmem>>, vector<128x128xf32>
    tpu.vector_store %arg6[%c0_6, %c0_7], %7 {strides = array<i32>} : memref<128x128xf32, #tpu.memory_space<vmem>>, vector<128x128xf32>,
    %c1_i32 = arith.constant 1 : i32
    %9 = arith.cmpi eq, %arg1, %c1_i32 : i32
    %10 = arith.extui %9 : i1 to i32
    %c0_i32_8 = arith.constant 0 : i32
    %11 = arith.cmpi ne, %10, %c0_i32_8 : i32
    scf.if %11 {
      %c0_9 = arith.constant 0 : index
      %c0_10 = arith.constant 0 : index
      %12 = vector.load %arg6[%c0_9, %c0_10] : memref<128x128xf32, #tpu.memory_space<vmem>>, vector<128x1xf32>
      %cst_11 = arith.constant 0.000000e+00 : f32
      %13 = vector.broadcast %cst_11 : f32 to vector<128x1xf32>
      %14 = arith.cmpf ogt, %12, %13 : vector<128x1xf32>
      %15 = math.rsqrt %12 : vector<128x1xf32>
      %cst_12 = arith.constant 0.000000e+00 : f32
      %16 = vector.broadcast %cst_12 : f32 to vector<128x1xf32>
      %17 = arith.select %14, %15, %16 : vector<128x1xi1>, vector<128x1xf32>
      %c0_13 = arith.constant 0 : index
      %c0_14 = arith.constant 0 : index
      %18 = vector.load %arg4[%c0_13, %c0_14] : memref<128x1xf32, #tpu.memory_space<vmem>>, vector<128x1xf32>
      tpu.vector_store %arg4[%c0_13, %c0_14], %17 {strides = array<i32>} : memref<128x1xf32, #tpu.memory_space<vmem>>, vector<128x1xf32>,
      %c0_15 = arith.constant 0 : index
      %c0_16 = arith.constant 0 : index
      %19 = vector.load %arg5[%c0_15, %c0_16] : memref<128x1xf32, #tpu.memory_space<vmem>>, vector<128x1xf32>
      tpu.vector_store %arg5[%c0_15, %c0_16], %17 {strides = array<i32>} : memref<128x1xf32, #tpu.memory_space<vmem>>, vector<128x1xf32>,
    } else {
    }
    return
  }
  func.func @transform_0(%arg0: i32, %arg1: i32) -> (i32, i32) {
    %c0_i32 = arith.constant 0 : i32
    return %arg0, %arg1 : i32, i32
  }
  func.func @transform_1(%arg0: i32, %arg1: i32) -> (i32, i32) {
    %c0_i32 = arith.constant 0 : i32
    %c0_i32_0 = arith.constant 0 : i32
    %c0_i32_1 = arith.constant 0 : i32
    return %c0_i32, %c0_i32_0 : i32, i32
  }
  func.func @transform_2(%arg0: i32, %arg1: i32) -> (i32, i32) {
    %c0_i32 = arith.constant 0 : i32
    %c0_i32_0 = arith.constant 0 : i32
    return %arg0, %c0_i32 : i32, i32
  }
  func.func @transform_3(%arg0: i32, %arg1: i32) -> (i32, i32) {
    %c0_i32 = arith.constant 0 : i32
    %c0_i32_0 = arith.constant 0 : i32
    return %arg0, %c0_i32 : i32, i32
  }
}

</mosaic_0001>

<llo_original>
// kernel: tpu_custom_call.1
$region0: #{tpu_custom_call.1}
  #allocation0 [shape = 'u32[]', space=smem, size = 0x4, offset = 0x4, fixed_abs, tag = 'smem constant byte address 0x4 - core index']
  #allocation1 [shape = 'u32[144,128]{1,0:T(1,128)}', space=vmem, size = 0x12000, scoped, tag = 'internal scratch']
  #allocation2 [shape = 'f32[128,128]{1,0:T(8,128)}', space=vmem, size = 0x10000, scoped, tag = 'scratch operand']
  %s0 = inlined_call_operand.hbm [shape: bf16[256,256], index: 0, kind: input, shape index: {}]
  %s1 = inlined_call_operand.hbm [shape: bf16[128,128], index: 1, kind: input, shape index: {}]
  %s2 = inlined_call_operand.vmem [shape: f32[256,1], index: 2, kind: output, shape index: {0}]
  %s3 = inlined_call_operand.vmem [shape: f32[256,1], index: 3, kind: output, shape index: {1}]
  %4 = xla_tuple %s2, %s3
  %s5 = sld [smem:[#allocation0]]
  $region65: #{tpu_custom_call.1} parent=0
    _
  %s7 = ssub.s32 1, %s5
  %s8 = scalar_select 0, %s7, %s5
  $region1: #{tpu_custom_call.1} parent=0
    #allocation3 [shape = 'u8[65536]{0}', space=vmem, size = 0x10000, scoped, tag = 'input window, operand 0']
    #allocation4 [shape = 's32[2]{0}', space=sflag, size = 0x8, scoped, tag = 'scoped memory for tpu_custom_call.1']
    #allocation5 [shape = 'u8[32768]{0}', space=vmem, size = 0x8000, scoped, tag = 'input window, operand 1, single buffered']
    #allocation6 [shape = 's32[1]{0}', space=sflag, size = 0x4, scoped, tag = 'scoped memory for tpu_custom_call.1']
    %9 = vsyncpa [#allocation4], 0
    %s10 = scalar_lea.sflag [#allocation4], 1
    %11 = vsyncpa %s10, 0
    %12 = vsyncpa [#allocation6], 0
    loop: start=0, step=1, limit=6
    $region2: #{tpu_custom_call.1} parent=1 // loop_pre_header
      _
    $region3: #{tpu_custom_call.1} parent=1 // loop_header
      %s14 = sphi 0, %s18
      %p15 = scmp.ge.s32.totalorder %s14, 6
      %s21 = sphi 0, %s33
      %s22 = sphi 0, %s29
      %s23 = sphi 0, %s21
      %s24 = sphi 0, %s22
      %s25 = sphi 0, %s23
      %s26 = sphi 0, %s24
      %s38 = sphi 0, %s40
      %s41 = sphi 0, %s38
      %s42 = sphi 0, %s41
      %s58 = sphi 0, %s42
      %s62 = sphi 0, %s62
      %s64 = sphi 0, %s62
      %s65 = sphi 0, %s64
      %s79 = sphi 0, %s65
      %s85 = sphi 0, %s87
      %s88 = sphi 0, %s85
      %s89 = sphi 0, %s88
      %s105 = sphi 0, %s89
      %s111 = sphi 0, %s113
      %s114 = sphi 0, %s111
      %s115 = sphi 0, %s114
      %s131 = sphi 0, %s115
    $region4: #{tpu_custom_call.1} parent=1 // loop_header_branch
      %17 = sbr.rel (%p15) target = $region8
    $region5: #{tpu_custom_call.1} parent=1 // loop_body
      %s19 = ssub.s32 %s14, 1
      %s20 = ssub.s32 %s14, 2
      %s27 = sadd.s32 1, %s22
      %p28 = scmp.ge.s32.totalorder %s27, 2
      %s29 = scalar_select %p28, 0, %s27
      %s30 = sadd.s32 1, %s21
      %s31 = scalar_select %p28, %s30, %s21
      %p32 = scmp.ge.s32.totalorder %s31, 2
      %s33 = scalar_select %p32, 0, %s31
      %s34 = ssub.s32 %s21, %s33
      %s35 = ssub.s32 %s22, %s29
      %s36 = sor.u32 %s34, %s35
      %p37 = scmp.eq.s32.totalorder %s36, 0
      %s39 = sadd.s32 %s38, 1
      %s40 = scalar_select %p37, %s38, %s39
      %p43 = pneg %p37
      %p44 = scmp.eq.s32.totalorder %s14, 3
      %p45 = por %p43, %p44
      %p46 = scmp.ne.s32.totalorder %s38, %s41
      %p47 = scmp.eq.s32.totalorder %s14, 0
      %p48 = por %p46, %p47
      %p49 = scmp.ne.s32.totalorder %s38, %s41
      %p50 = scmp.eq.s32.totalorder %s19, 3
      %p51 = por %p49, %p50
      %p52 = scmp.ne.s32.totalorder %s41, %s42
      %p53 = scmp.eq.s32.totalorder %s19, 0
      %p54 = por %p52, %p53
      %p55 = scmp.ne.s32.totalorder %s41, %s42
      %p56 = scmp.eq.s32.totalorder %s20, 3
      %p57 = por %p55, %p56
      %p59 = scmp.ne.s32.totalorder %s42, %s58
      %p60 = scmp.eq.s32.totalorder %s20, 0
      %p61 = por %p59, %p60
      %s63 = sadd.s32 %s62, 1
      %p66 = scmp.eq.s32.totalorder %s14, 3
      %p67 = scmp.ne.s32.totalorder %s62, %s64
      %p68 = scmp.eq.s32.totalorder %s14, 0
      %p69 = por %p67, %p68
      %p70 = scmp.ne.s32.totalorder %s62, %s64
      %p71 = scmp.eq.s32.totalorder %s19, 3
      %p72 = por %p70, %p71
      %p73 = scmp.ne.s32.totalorder %s64, %s65
      %p74 = scmp.eq.s32.totalorder %s19, 0
      %p75 = por %p73, %p74
      %p76 = scmp.ne.s32.totalorder %s64, %s65
      %p77 = scmp.eq.s32.totalorder %s20, 3
      %p78 = por %p76, %p77
      %p80 = scmp.ne.s32.totalorder %s65, %s79
      %p81 = scmp.eq.s32.totalorder %s20, 0
      %p82 = por %p80, %p81
      %s83 = ssub.s32 %s21, %s33
      %p84 = scmp.eq.s32.totalorder %s83, 0
      %s86 = sadd.s32 %s85, 1
      %s87 = scalar_select %p84, %s85, %s86
      %p90 = pneg %p84
      %p91 = scmp.eq.s32.totalorder %s14, 3
      %p92 = por %p90, %p91
      %p93 = scmp.ne.s32.totalorder %s85, %s88
      %p94 = scmp.eq.s32.totalorder %s14, 0
      %p95 = por %p93, %p94
      %p96 = scmp.ne.s32.totalorder %s85, %s88
      %p97 = scmp.eq.s32.totalorder %s19, 3
      %p98 = por %p96, %p97
      %p99 = scmp.ne.s32.totalorder %s88, %s89
      %p100 = scmp.eq.s32.totalorder %s19, 0
      %p101 = por %p99, %p100
      %p102 = scmp.ne.s32.totalorder %s88, %s89
      %p103 = scmp.eq.s32.totalorder %s20, 3
      %p104 = por %p102, %p103
      %p106 = scmp.ne.s32.totalorder %s89, %s105
      %p107 = scmp.eq.s32.totalorder %s20, 0
      %p108 = por %p106, %p107
      %s109 = ssub.s32 %s21, %s33
      %p110 = scmp.eq.s32.totalorder %s109, 0
      %s112 = sadd.s32 %s111, 1
      %s113 = scalar_select %p110, %s111, %s112
      %p116 = pneg %p110
      %p117 = scmp.eq.s32.totalorder %s14, 3
      %p118 = por %p116, %p117
      %p119 = scmp.ne.s32.totalorder %s111, %s114
      %p120 = scmp.eq.s32.totalorder %s14, 0
      %p121 = por %p119, %p120
      %p122 = scmp.ne.s32.totalorder %s111, %s114
      %p123 = scmp.eq.s32.totalorder %s19, 3
      %p124 = por %p122, %p123
      %p125 = scmp.ne.s32.totalorder %s114, %s115
      %p126 = scmp.eq.s32.totalorder %s19, 0
      %p127 = por %p125, %p126
      %p128 = scmp.ne.s32.totalorder %s114, %s115
      %p129 = scmp.eq.s32.totalorder %s20, 3
      %p130 = por %p128, %p129
      %p132 = scmp.ne.s32.totalorder %s115, %s131
      %p133 = scmp.eq.s32.totalorder %s20, 0
      %p134 = por %p132, %p133
      %p135 = scmp.le.s32.totalorder 1, %s14
      %p136 = scmp.lt.s32.totalorder %s14, 5
      %p137 = pnand %p135, %p136
      %p138 = pneg %p137
      // Predicated region
      $region9: #{tpu_custom_call.1} parent=5 // pred_check
        _
      $region10: #{tpu_custom_call.1} parent=5 // pred_check_branch
        %140 = sbr.rel (%p137) target = $region12
      $region11: #{tpu_custom_call.1} parent=5 // pred_region
        %s141 = ssub.s32 %s14, 1
        // Predicated region
        $region13: #{tpu_custom_call.1} parent=11 // pred_check
          %p142 = pneg %p75
        $region14: #{tpu_custom_call.1} parent=11 // pred_check_branch
          %144 = sbr.rel (%p142) target = $region16
        $region15: #{tpu_custom_call.1} parent=11 // pred_region
          %s146 = ssub.s32 1024, 1024
          %147 = vsyncadd [#allocation6], %s146
          %s148 = sshll.u32 [#allocation5], 4
          %s149 = int_to_ptr.vmem [resolvable:$true] %s148
          %154 = dma.hbm_to_vmem [thread:$0]  %s1, 1024, %s149, [#allocation6], 64, 64, 4
        $region16: #{tpu_custom_call.1} parent=11 // pred_fallthru
          _
      $region12: #{tpu_custom_call.1} parent=5 // pred_fallthru
        _
      %p155 = scmp.lt.s32.totalorder %s14, 4
      // Predicated region
      $region17: #{tpu_custom_call.1} parent=5 // pred_check
        %p156 = pneg %p155
      $region18: #{tpu_custom_call.1} parent=5 // pred_check_branch
        %158 = sbr.rel (%p156) target = $region20
      $region19: #{tpu_custom_call.1} parent=5 // pred_region
        // Predicated region
        $region21: #{tpu_custom_call.1} parent=19 // pred_check
          %p159 = pneg %p48
        $region22: #{tpu_custom_call.1} parent=19 // pred_check_branch
          %161 = sbr.rel (%p159) target = $region24
        $region23: #{tpu_custom_call.1} parent=19 // pred_region
          %s162 = sand.u32 %s38, 1
          %s163 = scalar_lea.sflag [#allocation4], %s162
          %s164 = sand.u32 %s38, 1
          %s165 = smul.addr %s164, 64
          %s166 = scalar_lea.vmem [#allocation3], %s165
          %s167 = smul.u32 16, %s21
          %s169 = ssub.s32 1024, 1024
          %170 = vsyncadd %s163, %s169
          %s171 = smul.addr %s167, 2
          %s172 = sadd.s32 %s22, %s171
          %s173 = smul.addr %s172, 64
          %s174 = scalar_lea.hbm %s0, %s173
          %s175 = sshll.u32 %s166, 4
          %s176 = int_to_ptr.vmem [resolvable:$true] %s175
          %181 = dma.hbm_to_vmem [thread:$0]  %s174, 1024, %s176, %s163, 128, 64, 4
        $region24: #{tpu_custom_call.1} parent=19 // pred_fallthru
          _
      $region20: #{tpu_custom_call.1} parent=5 // pred_fallthru
        _
      %p182 = scmp.le.s32.totalorder 1, %s14
      %p183 = scmp.lt.s32.totalorder %s14, 5
      %p184 = pnand %p182, %p183
      %p185 = pneg %p184
      // Predicated region
      $region25: #{tpu_custom_call.1} parent=5 // pred_check
        _
      $region26: #{tpu_custom_call.1} parent=5 // pred_check_branch
        %187 = sbr.rel (%p184) target = $region28
      $region27: #{tpu_custom_call.1} parent=5 // pred_region
        %s188 = ssub.s32 %s14, 1
        %s189 = sand.u32 %s41, 1
        %s190 = scalar_lea.sflag [#allocation4], %s189
        %s191 = sand.u32 %s41, 1
        %s192 = smul.addr %s191, 64
        %s193 = scalar_lea.vmem [#allocation3], %s192
        // Predicated region
        $region29: #{tpu_custom_call.1} parent=27 // pred_check
          %p194 = pneg %p54
        $region30: #{tpu_custom_call.1} parent=27 // pred_check_branch
          %196 = sbr.rel (%p194) target = $region32
        $region31: #{tpu_custom_call.1} parent=27 // pred_region
          %197 = dma.done %s190, 1024
        $region32: #{tpu_custom_call.1} parent=27 // pred_fallthru
          _
        // Predicated region
        $region33: #{tpu_custom_call.1} parent=27 // pred_check
          %p198 = pneg %p75
        $region34: #{tpu_custom_call.1} parent=27 // pred_check_branch
          %200 = sbr.rel (%p198) target = $region36
        $region35: #{tpu_custom_call.1} parent=27 // pred_region
          %201 = dma.done [#allocation6], 1024
        $region36: #{tpu_custom_call.1} parent=27 // pred_fallthru
          _
        %s202 = sand.u32 %s41, 1
        %s203 = scalar_lea.sflag [#allocation4], %s202
        %s204 = sand.u32 %s41, 1
        %s205 = smul.addr %s204, 64
        %s206 = scalar_lea.vmem [#allocation3], %s205
        %p207 = pneg %p54
        %p208 = pneg %p51
        %p209 = pneg %p75
        %p210 = pneg %p72
        %p211 = pneg %p101
        %p212 = pneg %p98
        %s213 = smul.u32 16, %s23
        %p214 = scmp.lt.s32.totalorder %s213, 31
        %s215 = scalar_select %p214, %s213, 31
        %s216 = smul.addr %s215, 8
        %s217 = scalar_lea.vmem %s2, %s216
        %p218 = pneg %p127
        %p219 = pneg %p124
        %s220 = smul.u32 16, %s23
        %p221 = scmp.lt.s32.totalorder %s220, 31
        %s222 = scalar_select %p221, %s220, 31
        %s223 = smul.addr %s222, 8
        %s224 = scalar_lea.vmem %s3, %s223
        %s225 = smul.u32 16, %s23
        %s226 = smul.u32 16, %s23
        %p227 = scmp.lt.s32.totalorder %s226, 31
        %s228 = scalar_select %p227, %s226, 31
        %s229 = smul.addr %s228, 8
        %s230 = scalar_lea.vmem %s2, %s229
        %s231 = smul.u32 16, %s23
        %s232 = smul.u32 16, %s23
        %p233 = scmp.lt.s32.totalorder %s232, 31
        %s234 = scalar_select %p233, %s232, 31
        %s235 = smul.addr %s234, 8
        %s236 = scalar_lea.vmem %s3, %s235
        %s237 = smul.u32 16, %s23
        %p239 = scmp.eq.s32.totalorder %s24, 0
        // Predicated region
        $region37: #{tpu_custom_call.1} parent=27 // pred_check
          %p240 = pneg %p239
        $region38: #{tpu_custom_call.1} parent=27 // pred_check_branch
          %242 = sbr.rel (%p240) target = $region40
        $region39: #{tpu_custom_call.1} parent=27 // pred_region
          %243 = vst [vmem:[#allocation2] sm:$0xff] 0.0
          %244 = vst [vmem:[#allocation2 + $0x8] sm:$0xff] 0.0
          %245 = vst [vmem:[#allocation2 + $0x10] sm:$0xff] 0.0
          %246 = vst [vmem:[#allocation2 + $0x18] sm:$0xff] 0.0
          %247 = vst [vmem:[#allocation2 + $0x20] sm:$0xff] 0.0
          %248 = vst [vmem:[#allocation2 + $0x28] sm:$0xff] 0.0
          %249 = vst [vmem:[#allocation2 + $0x30] sm:$0xff] 0.0
          %250 = vst [vmem:[#allocation2 + $0x38] sm:$0xff] 0.0
          %251 = vst [vmem:[#allocation2 + $0x40] sm:$0xff] 0.0
          %252 = vst [vmem:[#allocation2 + $0x48] sm:$0xff] 0.0
          %253 = vst [vmem:[#allocation2 + $0x50] sm:$0xff] 0.0
          %254 = vst [vmem:[#allocation2 + $0x58] sm:$0xff] 0.0
          %255 = vst [vmem:[#allocation2 + $0x60] sm:$0xff] 0.0
          %256 = vst [vmem:[#allocation2 + $0x68] sm:$0xff] 0.0
          %257 = vst [vmem:[#allocation2 + $0x70] sm:$0xff] 0.0
          %258 = vst [vmem:[#allocation2 + $0x78] sm:$0xff] 0.0
        $region40: #{tpu_custom_call.1} parent=27 // pred_fallthru
          _
        %v259 = vld [vmem:[#allocation2] sm:$0xff]
        %v260 = vld [vmem:[#allocation2 + $0x8] sm:$0xff]
        %v261 = vld [vmem:[#allocation2 + $0x10] sm:$0xff]
        %v262 = vld [vmem:[#allocation2 + $0x18] sm:$0xff]
        %v263 = vld [vmem:[#allocation2 + $0x20] sm:$0xff]
        %v264 = vld [vmem:[#allocation2 + $0x28] sm:$0xff]
        %v265 = vld [vmem:[#allocation2 + $0x30] sm:$0xff]
        %v266 = vld [vmem:[#allocation2 + $0x38] sm:$0xff]
        %v267 = vld [vmem:[#allocation2 + $0x40] sm:$0xff]
        %v268 = vld [vmem:[#allocation2 + $0x48] sm:$0xff]
        %v269 = vld [vmem:[#allocation2 + $0x50] sm:$0xff]
        %v270 = vld [vmem:[#allocation2 + $0x58] sm:$0xff]
        %v271 = vld [vmem:[#allocation2 + $0x60] sm:$0xff]
        %v272 = vld [vmem:[#allocation2 + $0x68] sm:$0xff]
        %v273 = vld [vmem:[#allocation2 + $0x70] sm:$0xff]
        %v274 = vld [vmem:[#allocation2 + $0x78] sm:$0xff]
        %v275 = vld [vmem:[%s193] sm:$0xf]
        %v276 = vld [vmem:[%s193 + $0x4] sm:$0xf]
        %v277 = vld [vmem:[%s193 + $0x8] sm:$0xf]
        %v278 = vld [vmem:[%s193 + $0xc] sm:$0xf]
        %v279 = vld [vmem:[%s193 + $0x10] sm:$0xf]
        %v280 = vld [vmem:[%s193 + $0x14] sm:$0xf]
        %v281 = vld [vmem:[%s193 + $0x18] sm:$0xf]
        %v282 = vld [vmem:[%s193 + $0x1c] sm:$0xf]
        %v283 = vld [vmem:[%s193 + $0x20] sm:$0xf]
        %v284 = vld [vmem:[%s193 + $0x24] sm:$0xf]
        %v285 = vld [vmem:[%s193 + $0x28] sm:$0xf]
        %v286 = vld [vmem:[%s193 + $0x2c] sm:$0xf]
        %v287 = vld [vmem:[%s193 + $0x30] sm:$0xf]
        %v288 = vld [vmem:[%s193 + $0x34] sm:$0xf]
        %v289 = vld [vmem:[%s193 + $0x38] sm:$0xf]
        %v290 = vld [vmem:[%s193 + $0x3c] sm:$0xf]
        %v291 = vld [vmem:[#allocation5] sm:$0xf]
        %v292 = vld [vmem:[#allocation5 + $0x4] sm:$0xf]
        %v293 = vld [vmem:[#allocation5 + $0x8] sm:$0xf]
        %v294 = vld [vmem:[#allocation5 + $0xc] sm:$0xf]
        %v295 = vld [vmem:[#allocation5 + $0x10] sm:$0xf]
        %v296 = vld [vmem:[#allocation5 + $0x14] sm:$0xf]
        %v297 = vld [vmem:[#allocation5 + $0x18] sm:$0xf]
        %v298 = vld [vmem:[#allocation5 + $0x1c] sm:$0xf]
        %v299 = vld [vmem:[#allocation5 + $0x20] sm:$0xf]
        %v300 = vld [vmem:[#allocation5 + $0x24] sm:$0xf]
        %v301 = vld [vmem:[#allocation5 + $0x28] sm:$0xf]
        %v302 = vld [vmem:[#allocation5 + $0x2c] sm:$0xf]
        %v303 = vld [vmem:[#allocation5 + $0x30] sm:$0xf]
        %v304 = vld [vmem:[#allocation5 + $0x34] sm:$0xf]
        %v305 = vld [vmem:[#allocation5 + $0x38] sm:$0xf]
        %v306 = vld [vmem:[#allocation5 + $0x3c] sm:$0xf]
        %v323 = vunpack.c.l.b16 %v275
        %v324 = vunpack.c.l.b16 %v276
        %v325 = vunpack.c.l.b16 %v277
        %v326 = vunpack.c.l.b16 %v278
        %v327 = vunpack.c.l.b16 %v279
        %v328 = vunpack.c.l.b16 %v280
        %v329 = vunpack.c.l.b16 %v281
        %v330 = vunpack.c.l.b16 %v282
        %v331 = vunpack.c.l.b16 %v283
        %v332 = vunpack.c.l.b16 %v284
        %v333 = vunpack.c.l.b16 %v285
        %v334 = vunpack.c.l.b16 %v286
        %v335 = vunpack.c.l.b16 %v287
        %v336 = vunpack.c.l.b16 %v288
        %v337 = vunpack.c.l.b16 %v289
        %v338 = vunpack.c.l.b16 %v290
        %v339 = vpack.c.b16 %v324, %v323
        %v340 = vpack.c.b16 %v326, %v325
        %v341 = vpack.c.b16 %v328, %v327
        %v342 = vpack.c.b16 %v330, %v329
        %v343 = vpack.c.b16 %v332, %v331
        %v344 = vpack.c.b16 %v334, %v333
        %v345 = vpack.c.b16 %v336, %v335
        %v346 = vpack.c.b16 %v338, %v337
        %v371 = vunpack.c.l.b16 %v291
        %v372 = vunpack.c.l.b16 %v292
        %v373 = vunpack.c.l.b16 %v293
        %v374 = vunpack.c.l.b16 %v294
        %v375 = vunpack.c.l.b16 %v295
        %v376 = vunpack.c.l.b16 %v296
        %v377 = vunpack.c.l.b16 %v297
        %v378 = vunpack.c.l.b16 %v298
        %v379 = vunpack.c.l.b16 %v299
        %v380 = vunpack.c.l.b16 %v300
        %v381 = vunpack.c.l.b16 %v301
        %v382 = vunpack.c.l.b16 %v302
        %v383 = vunpack.c.l.b16 %v303
        %v384 = vunpack.c.l.b16 %v304
        %v385 = vunpack.c.l.b16 %v305
        %v386 = vunpack.c.l.b16 %v306
        %v387 = vpack.c.b16 %v372, %v371
        %v388 = vpack.c.b16 %v374, %v373
        %v389 = vpack.c.b16 %v376, %v375
        %v390 = vpack.c.b16 %v378, %v377
        %v391 = vpack.c.b16 %v380, %v379
        %v392 = vpack.c.b16 %v382, %v381
        %v393 = vpack.c.b16 %v384, %v383
        %v394 = vpack.c.b16 %v386, %v385
        %403 = vmatprep.subr.bf16.mxu0 0
        %404 = vmatpush1.bf16.msra.mxu0 %v387
        %405 = vmatprep.subr.bf16.mxu0 0
        %406 = vmatpush1.bf16.msra.mxu0 %v388
        %407 = vmatprep.subr.bf16.mxu0 0
        %408 = vmatpush1.bf16.msra.mxu0 %v389
        %409 = vmatprep.subr.bf16.mxu0 0
        %410 = vmatpush1.bf16.msra.mxu0 %v390
        %411 = vmatprep.subr.bf16.mxu0 0
        %412 = vmatpush1.bf16.msra.mxu0 %v391
        %413 = vmatprep.subr.bf16.mxu0 0
        %414 = vmatpush1.bf16.msra.mxu0 %v392
        %415 = vmatprep.subr.bf16.mxu0 0
        %416 = vmatpush1.bf16.msra.mxu0 %v393
        %417 = vmatprep.subr.bf16.mxu0 0
        %418 = vmatpush1.bf16.msra.mxu0 %v394
        %419 = vmatprep.subr.bf16.mxu0 0
        %420 = vmatpush1.bf16.msra.mxu0 0
        %421 = vmatprep.subr.bf16.mxu0 0
        %422 = vmatpush1.bf16.msra.mxu0 0
        %423 = vmatprep.subr.bf16.mxu0 0
        %424 = vmatpush1.bf16.msra.mxu0 0
        %425 = vmatprep.subr.bf16.mxu0 0
        %426 = vmatpush1.bf16.msra.mxu0 0
        %427 = vmatprep.subr.bf16.mxu0 0
        %428 = vmatpush1.bf16.msra.mxu0 0
        %429 = vmatprep.subr.bf16.mxu0 0
        %430 = vmatpush1.bf16.msra.mxu0 0
        %431 = vmatprep.subr.bf16.mxu0 0
        %432 = vmatpush1.bf16.msra.mxu0 0
        %433 = vmatprep.subr.bf16.mxu0 0
        %434 = vmatpush1.bf16.msra.mxu0 0
        %435 = vmatprep.mubr.bf16.mxu0 0
        %436 = vmatmul.mubr.bf16.gmra.mrb[0].mxu0 %v339
        %v437 = vpop.f32.mrb[0].mxu0
        %v438 = vadd.f32 0.0, %v437
        %v439 = vpop.f32.mrb[0].mxu0
        %v440 = vpop.f32.mrb[0].mxu0
        %v441 = vadd.f32 0.0, %v440
        %v442 = vpop.f32.mrb[0].mxu0
        %443 = vmatprep.mubr.bf16.mxu0 0
        %444 = vmatmul.mubr.bf16.gmra.mrb[0].mxu0 %v340
        %v445 = vpop.f32.mrb[0].mxu0
        %v446 = vadd.f32 0.0, %v445
        %v447 = vpop.f32.mrb[0].mxu0
        %v448 = vpop.f32.mrb[0].mxu0
        %v449 = vadd.f32 0.0, %v448
        %v450 = vpop.f32.mrb[0].mxu0
        %451 = vmatprep.mubr.bf16.mxu0 0
        %452 = vmatmul.mubr.bf16.gmra.mrb[0].mxu0 %v341
        %v453 = vpop.f32.mrb[0].mxu0
        %v454 = vadd.f32 0.0, %v453
        %v455 = vpop.f32.mrb[0].mxu0
        %v456 = vpop.f32.mrb[0].mxu0
        %v457 = vadd.f32 0.0, %v456
        %v458 = vpop.f32.mrb[0].mxu0
        %459 = vmatprep.mubr.bf16.mxu0 0
        %460 = vmatmul.mubr.bf16.gmra.mrb[0].mxu0 %v342
        %v461 = vpop.f32.mrb[0].mxu0
        %v462 = vadd.f32 0.0, %v461
        %v463 = vpop.f32.mrb[0].mxu0
        %v464 = vpop.f32.mrb[0].mxu0
        %v465 = vadd.f32 0.0, %v464
        %v466 = vpop.f32.mrb[0].mxu0
        %467 = vmatprep.mubr.bf16.mxu0 0
        %468 = vmatmul.mubr.bf16.gmra.mrb[0].mxu0 %v343
        %v469 = vpop.f32.mrb[0].mxu0
        %v470 = vadd.f32 0.0, %v469
        %v471 = vpop.f32.mrb[0].mxu0
        %v472 = vpop.f32.mrb[0].mxu0
        %v473 = vadd.f32 0.0, %v472
        %v474 = vpop.f32.mrb[0].mxu0
        %475 = vmatprep.mubr.bf16.mxu0 0
        %476 = vmatmul.mubr.bf16.gmra.mrb[0].mxu0 %v344
        %v477 = vpop.f32.mrb[0].mxu0
        %v478 = vadd.f32 0.0, %v477
        %v479 = vpop.f32.mrb[0].mxu0
        %v480 = vpop.f32.mrb[0].mxu0
        %v481 = vadd.f32 0.0, %v480
        %v482 = vpop.f32.mrb[0].mxu0
        %483 = vmatprep.mubr.bf16.mxu0 0
        %484 = vmatmul.mubr.bf16.gmra.mrb[0].mxu0 %v345
        %v485 = vpop.f32.mrb[0].mxu0
        %v486 = vadd.f32 0.0, %v485
        %v487 = vpop.f32.mrb[0].mxu0
        %v488 = vpop.f32.mrb[0].mxu0
        %v489 = vadd.f32 0.0, %v488
        %v490 = vpop.f32.mrb[0].mxu0
        %491 = vmatprep.mubr.bf16.mxu0 0
        %492 = vmatmul.mubr.bf16.gmra.mrb[0].mxu0 %v346
        %v493 = vpop.f32.mrb[0].mxu0
        %v494 = vadd.f32 0.0, %v493
        %v495 = vpop.f32.mrb[0].mxu0
        %v496 = vpop.f32.mrb[0].mxu0
        %v497 = vadd.f32 0.0, %v496
        %v498 = vpop.f32.mrb[0].mxu0
        %499 = vdwg.mxu0
        %v500 = vadd.f32 %v259, %v438
        %v501 = vadd.f32 %v260, %v441
        %v502 = vadd.f32 %v261, %v446
        %v503 = vadd.f32 %v262, %v449
        %v504 = vadd.f32 %v263, %v454
        %v505 = vadd.f32 %v264, %v457
        %v506 = vadd.f32 %v265, %v462
        %v507 = vadd.f32 %v266, %v465
        %v508 = vadd.f32 %v267, %v470
        %v509 = vadd.f32 %v268, %v473
        %v510 = vadd.f32 %v269, %v478
        %v511 = vadd.f32 %v270, %v481
        %v512 = vadd.f32 %v271, %v486
        %v513 = vadd.f32 %v272, %v489
        %v514 = vadd.f32 %v273, %v494
        %v515 = vadd.f32 %v274, %v497
        %516 = vst [vmem:[#allocation2] sm:$0xff] %v500
        %517 = vst [vmem:[#allocation2 + $0x8] sm:$0xff] %v501
        %518 = vst [vmem:[#allocation2 + $0x10] sm:$0xff] %v502
        %519 = vst [vmem:[#allocation2 + $0x18] sm:$0xff] %v503
        %520 = vst [vmem:[#allocation2 + $0x20] sm:$0xff] %v504
        %521 = vst [vmem:[#allocation2 + $0x28] sm:$0xff] %v505
        %522 = vst [vmem:[#allocation2 + $0x30] sm:$0xff] %v506
        %523 = vst [vmem:[#allocation2 + $0x38] sm:$0xff] %v507
        %524 = vst [vmem:[#allocation2 + $0x40] sm:$0xff] %v508
        %525 = vst [vmem:[#allocation2 + $0x48] sm:$0xff] %v509
        %526 = vst [vmem:[#allocation2 + $0x50] sm:$0xff] %v510
        %527 = vst [vmem:[#allocation2 + $0x58] sm:$0xff] %v511
        %528 = vst [vmem:[#allocation2 + $0x60] sm:$0xff] %v512
        %529 = vst [vmem:[#allocation2 + $0x68] sm:$0xff] %v513
        %530 = vst [vmem:[#allocation2 + $0x70] sm:$0xff] %v514
        %531 = vst [vmem:[#allocation2 + $0x78] sm:$0xff] %v515
        %p532 = scmp.eq.s32.totalorder %s24, 1
        // Predicated region
        $region41: #{tpu_custom_call.1} parent=27 // pred_check
          %p533 = pneg %p532
        $region42: #{tpu_custom_call.1} parent=27 // pred_check_branch
          %535 = sbr.rel (%p533) target = $region44
        $region43: #{tpu_custom_call.1} parent=27 // pred_region
          %v536 = vld [vmem:[#allocation2] sm:$0xff]
          %v537 = vld [vmem:[#allocation2 + $0x8] sm:$0xff]
          %v538 = vld [vmem:[#allocation2 + $0x10] sm:$0xff]
          %v539 = vld [vmem:[#allocation2 + $0x18] sm:$0xff]
          %v540 = vld [vmem:[#allocation2 + $0x20] sm:$0xff]
          %v541 = vld [vmem:[#allocation2 + $0x28] sm:$0xff]
          %v542 = vld [vmem:[#allocation2 + $0x30] sm:$0xff]
          %v543 = vld [vmem:[#allocation2 + $0x38] sm:$0xff]
          %v544 = vld [vmem:[#allocation2 + $0x40] sm:$0xff]
          %v545 = vld [vmem:[#allocation2 + $0x48] sm:$0xff]
          %v546 = vld [vmem:[#allocation2 + $0x50] sm:$0xff]
          %v547 = vld [vmem:[#allocation2 + $0x58] sm:$0xff]
          %v548 = vld [vmem:[#allocation2 + $0x60] sm:$0xff]
          %v549 = vld [vmem:[#allocation2 + $0x68] sm:$0xff]
          %v550 = vld [vmem:[#allocation2 + $0x70] sm:$0xff]
          %v551 = vld [vmem:[#allocation2 + $0x78] sm:$0xff]
          %vm552 = vcmp.gt.f32.partialorder %v536, 0.0
          %vm553 = vcmp.gt.f32.partialorder %v537, 0.0
          %vm554 = vcmp.gt.f32.partialorder %v538, 0.0
          %vm555 = vcmp.gt.f32.partialorder %v539, 0.0
          %vm556 = vcmp.gt.f32.partialorder %v540, 0.0
          %vm557 = vcmp.gt.f32.partialorder %v541, 0.0
          %vm558 = vcmp.gt.f32.partialorder %v542, 0.0
          %vm559 = vcmp.gt.f32.partialorder %v543, 0.0
          %vm560 = vcmp.gt.f32.partialorder %v544, 0.0
          %vm561 = vcmp.gt.f32.partialorder %v545, 0.0
          %vm562 = vcmp.gt.f32.partialorder %v546, 0.0
          %vm563 = vcmp.gt.f32.partialorder %v547, 0.0
          %vm564 = vcmp.gt.f32.partialorder %v548, 0.0
          %vm565 = vcmp.gt.f32.partialorder %v549, 0.0
          %vm566 = vcmp.gt.f32.partialorder %v550, 0.0
          %vm567 = vcmp.gt.f32.partialorder %v551, 0.0
          %v568 = vrsqrt.pop %v536
          %v569 = vrsqrt.pop %v537
          %v570 = vrsqrt.pop %v538
          %v571 = vrsqrt.pop %v539
          %v572 = vrsqrt.pop %v540
          %v573 = vrsqrt.pop %v541
          %v574 = vrsqrt.pop %v542
          %v575 = vrsqrt.pop %v543
          %v576 = vrsqrt.pop %v544
          %v577 = vrsqrt.pop %v545
          %v578 = vrsqrt.pop %v546
          %v579 = vrsqrt.pop %v547
          %v580 = vrsqrt.pop %v548
          %v581 = vrsqrt.pop %v549
          %v582 = vrsqrt.pop %v550
          %v583 = vrsqrt.pop %v551
          %v584 = vsel %vm552, %v568, 0.0
          %v585 = vsel %vm553, %v569, 0.0
          %v586 = vsel %vm554, %v570, 0.0
          %v587 = vsel %vm555, %v571, 0.0
          %v588 = vsel %vm556, %v572, 0.0
          %v589 = vsel %vm557, %v573, 0.0
          %v590 = vsel %vm558, %v574, 0.0
          %v591 = vsel %vm559, %v575, 0.0
          %v592 = vsel %vm560, %v576, 0.0
          %v593 = vsel %vm561, %v577, 0.0
          %v594 = vsel %vm562, %v578, 0.0
          %v595 = vsel %vm563, %v579, 0.0
          %v596 = vsel %vm564, %v580, 0.0
          %v597 = vsel %vm565, %v581, 0.0
          %v598 = vsel %vm566, %v582, 0.0
          %v599 = vsel %vm567, %v583, 0.0
          %vm600 = vcmask 7168
          %601 = vst.msk [vmem:[%s230] sm:$0xff] %vm600, %v584
          %602 = vst.msk [vmem:[%s230 + $0x8] sm:$0xff] %vm600, %v585
          %603 = vst.msk [vmem:[%s230 + $0x10] sm:$0xff] %vm600, %v586
          %604 = vst.msk [vmem:[%s230 + $0x18] sm:$0xff] %vm600, %v587
          %605 = vst.msk [vmem:[%s230 + $0x20] sm:$0xff] %vm600, %v588
          %606 = vst.msk [vmem:[%s230 + $0x28] sm:$0xff] %vm600, %v589
          %607 = vst.msk [vmem:[%s230 + $0x30] sm:$0xff] %vm600, %v590
          %608 = vst.msk [vmem:[%s230 + $0x38] sm:$0xff] %vm600, %v591
          %609 = vst.msk [vmem:[%s230 + $0x40] sm:$0xff] %vm600, %v592
          %610 = vst.msk [vmem:[%s230 + $0x48] sm:$0xff] %vm600, %v593
          %611 = vst.msk [vmem:[%s230 + $0x50] sm:$0xff] %vm600, %v594
          %612 = vst.msk [vmem:[%s230 + $0x58] sm:$0xff] %vm600, %v595
          %613 = vst.msk [vmem:[%s230 + $0x60] sm:$0xff] %vm600, %v596
          %614 = vst.msk [vmem:[%s230 + $0x68] sm:$0xff] %vm600, %v597
          %615 = vst.msk [vmem:[%s230 + $0x70] sm:$0xff] %vm600, %v598
          %616 = vst.msk [vmem:[%s230 + $0x78] sm:$0xff] %vm600, %v599
          %617 = vst.msk [vmem:[%s236] sm:$0xff] %vm600, %v584
          %618 = vst.msk [vmem:[%s236 + $0x8] sm:$0xff] %vm600, %v585
          %619 = vst.msk [vmem:[%s236 + $0x10] sm:$0xff] %vm600, %v586
          %620 = vst.msk [vmem:[%s236 + $0x18] sm:$0xff] %vm600, %v587
          %621 = vst.msk [vmem:[%s236 + $0x20] sm:$0xff] %vm600, %v588
          %622 = vst.msk [vmem:[%s236 + $0x28] sm:$0xff] %vm600, %v589
          %623 = vst.msk [vmem:[%s236 + $0x30] sm:$0xff] %vm600, %v590
          %624 = vst.msk [vmem:[%s236 + $0x38] sm:$0xff] %vm600, %v591
          %625 = vst.msk [vmem:[%s236 + $0x40] sm:$0xff] %vm600, %v592
          %626 = vst.msk [vmem:[%s236 + $0x48] sm:$0xff] %vm600, %v593
          %627 = vst.msk [vmem:[%s236 + $0x50] sm:$0xff] %vm600, %v594
          %628 = vst.msk [vmem:[%s236 + $0x58] sm:$0xff] %vm600, %v595
          %629 = vst.msk [vmem:[%s236 + $0x60] sm:$0xff] %vm600, %v596
          %630 = vst.msk [vmem:[%s236 + $0x68] sm:$0xff] %vm600, %v597
          %631 = vst.msk [vmem:[%s236 + $0x70] sm:$0xff] %vm600, %v598
          %632 = vst.msk [vmem:[%s236 + $0x78] sm:$0xff] %vm600, %v599
        $region44: #{tpu_custom_call.1} parent=27 // pred_fallthru
          _
        %s633 = smul.u32 16, %s23
        %p634 = scmp.lt.s32.totalorder %s633, 31
        %s635 = scalar_select %p634, %s633, 31
        %s636 = smul.addr %s635, 8
        %s637 = scalar_lea.vmem %s2, %s636
        %s638 = smul.u32 16, %s23
        %p639 = scmp.lt.s32.totalorder %s638, 31
        %s640 = scalar_select %p639, %s638, 31
        %s641 = smul.addr %s640, 8
        %s642 = scalar_lea.vmem %s3, %s641
        // Predicated region
        $region45: #{tpu_custom_call.1} parent=27 // pred_check
          %p643 = pneg %p98
        $region46: #{tpu_custom_call.1} parent=27 // pred_check_branch
          %645 = sbr.rel (%p643) target = $region48
        $region47: #{tpu_custom_call.1} parent=27 // pred_region
          %s646 = smul.u32 16, %s23
        $region48: #{tpu_custom_call.1} parent=27 // pred_fallthru
          _
        // Predicated region
        $region49: #{tpu_custom_call.1} parent=27 // pred_check
          %p647 = pneg %p124
        $region50: #{tpu_custom_call.1} parent=27 // pred_check_branch
          %649 = sbr.rel (%p647) target = $region52
        $region51: #{tpu_custom_call.1} parent=27 // pred_region
          %s650 = smul.u32 16, %s23
        $region52: #{tpu_custom_call.1} parent=27 // pred_fallthru
          _
      $region28: #{tpu_custom_call.1} parent=5 // pred_fallthru
        _
      %p651 = scmp.le.s32.totalorder 2, %s14
      // Predicated region
      $region53: #{tpu_custom_call.1} parent=5 // pred_check
        %p652 = pneg %p651
      $region54: #{tpu_custom_call.1} parent=5 // pred_check_branch
        %654 = sbr.rel (%p652) target = $region56
      $region55: #{tpu_custom_call.1} parent=5 // pred_region
        %s655 = ssub.s32 %s14, 2
        // Predicated region
        $region57: #{tpu_custom_call.1} parent=55 // pred_check
          %p656 = pneg %p104
        $region58: #{tpu_custom_call.1} parent=55 // pred_check_branch
          %658 = sbr.rel (%p656) target = $region60
        $region59: #{tpu_custom_call.1} parent=55 // pred_region
          %s659 = smul.u32 16, %s25
          %p660 = scmp.lt.s32.totalorder %s659, 31
          %s661 = scalar_select %p660, %s659, 31
          %s662 = smul.addr %s661, 8
          %s663 = scalar_lea.vmem %s2, %s662
        $region60: #{tpu_custom_call.1} parent=55 // pred_fallthru
          _
        // Predicated region
        $region61: #{tpu_custom_call.1} parent=55 // pred_check
          %p664 = pneg %p130
        $region62: #{tpu_custom_call.1} parent=55 // pred_check_branch
          %666 = sbr.rel (%p664) target = $region64
        $region63: #{tpu_custom_call.1} parent=55 // pred_region
          %s667 = smul.u32 16, %s25
          %p668 = scmp.lt.s32.totalorder %s667, 31
          %s669 = scalar_select %p668, %s667, 31
          %s670 = smul.addr %s669, 8
          %s671 = scalar_lea.vmem %s3, %s670
        $region64: #{tpu_custom_call.1} parent=55 // pred_fallthru
          _
      $region56: #{tpu_custom_call.1} parent=5 // pred_fallthru
        _
    $region6: #{tpu_custom_call.1} parent=1 // loop_footer
      %s18 = sadd.s32 1, %s14
    $region7: #{tpu_custom_call.1} parent=1 // loop_footer_branch
      %13 = sbr.rel target = $region3
    $region8: #{tpu_custom_call.1} parent=1 // loop_exit
      _
    %672 = vsyncpa [#allocation4], 1
    %s673 = scalar_lea.sflag [#allocation4], 1
    %674 = vsyncpa %s673, 1
    %675 = vsyncpa [#allocation6], 1

</llo_original>
